<compile_context>
chip_gen: v7x
topology: tpu7x:2x2x1
jax: 0.10.0
libtpu: 0.0.40
codegen_flags: <defaults>
</compile_context>

<pallas_src>
import jax
import jax.numpy as jnp
from jax.experimental import pallas as pl
from jax.experimental.pallas import tpu as pltpu


def _lenet_server_kernel(x_ref, w1_ref, b1_ref, w2_ref, b2_ref, o_ref):
    # fc1: (TB, 500)bf16 @ (500, 128)bf16 -> f32 accumulate on the MXU.
    x = x_ref[...].astype(jnp.bfloat16)           # cast in-kernel; no wrapper pass
    h = jnp.dot(x, w1_ref[...], preferred_element_type=jnp.float32)
    h = jnp.maximum(h + b1_ref[...], 0.0)         # bias + ReLU in f32
    # dropout (eval mode) == identity
    # fc2: (TB, 128)bf16 @ (128, 10)bf16 -> (TB, 10) f32
    out = jnp.dot(h.astype(jnp.bfloat16), w2_ref[...],
                  preferred_element_type=jnp.float32)
    o_ref[...] = (out + b2_ref[...]).astype(o_ref.dtype)


def _round_up(n, m):
    return ((n + m - 1) // m) * m


def prepare_params(w1, b1, w2, b2):
    """One-time padding / bf16 cast of the weights (hoisted out of the call path).

    w1: (500, 50), b1: (1, 50), w2: (50, 10), b2: (1, 10)
    (weights stored transposed vs. PyTorch: (in_features, out_features)).
    Only the hidden dim (50 -> 128) is lane-padded; padded entries are zero,
    so they are numerically inert.
    """
    K, H = w1.shape
    O = w2.shape[1]
    H_pad = _round_up(H, 128)   # 50 -> 128
    w1p = jnp.zeros((K, H_pad), jnp.bfloat16).at[:, :H].set(w1.astype(jnp.bfloat16))
    b1p = jnp.zeros((1, H_pad), jnp.float32).at[:, :H].set(
        b1.astype(jnp.float32).reshape(1, H))
    w2p = jnp.zeros((H_pad, O), jnp.bfloat16).at[:H, :].set(w2.astype(jnp.bfloat16))
    b2p = b2.astype(jnp.float32).reshape(1, O)
    return w1p, b1p, w2p, b2p


def lenet_server_side(x, params, *, block_b=1024):
    """x: (B, 500) float32; params from prepare_params(). Returns (B, 10) float32."""
    w1p, b1p, w2p, b2p = params
    B, K = x.shape
    H_pad = w1p.shape[1]
    O = w2p.shape[1]

    # Batch tile: multiple of 8 sublanes, capped at block_b.  Ragged last tile
    # is handled by Pallas (partial block), so no batch padding is needed.
    TB = min(block_b, _round_up(B, 8))
    grid_b = pl.cdiv(B, TB)

    return pl.pallas_call(
        _lenet_server_kernel,
        out_shape=jax.ShapeDtypeStruct((B, O), jnp.float32),
        grid_spec=pl.GridSpec(
            grid=(grid_b,),
            in_specs=[
                pl.BlockSpec((TB, K), lambda i: (i, 0)),      # x: stream batch tiles
                pl.BlockSpec((K, H_pad), lambda i: (0, 0)),   # w1: VMEM-resident
                pl.BlockSpec((1, H_pad), lambda i: (0, 0)),   # b1: VMEM-resident
                pl.BlockSpec((H_pad, O), lambda i: (0, 0)),   # w2: VMEM-resident
                pl.BlockSpec((1, O), lambda i: (0, 0)),       # b2: VMEM-resident
            ],
            out_specs=pl.BlockSpec((TB, O), lambda i: (i, 0)),
        ),
        compiler_params=pltpu.CompilerParams(
            # Batch axis independent across steps -> megacore / v7x 2-TC shard.
            dimension_semantics=("parallel",),
        ),
    )(x, w1p, b1p, w2p, b2p)


def init_params(key):
    """Deterministic init mimicking nn.Linear default: U(-1/sqrt(fan_in), ...).
    Weights stored as (in_features, out_features)."""
    k1, k2, k3, k4 = jax.random.split(key, 4)
    bound1 = 1.0 / (500.0 ** 0.5)
    bound2 = 1.0 / (50.0 ** 0.5)
    w1 = jax.random.uniform(k1, (500, 50), jnp.float32, -bound1, bound1)
    b1 = jax.random.uniform(k2, (1, 50), jnp.float32, -bound1, bound1)
    w2 = jax.random.uniform(k3, (50, 10), jnp.float32, -bound2, bound2)
    b2 = jax.random.uniform(k4, (1, 10), jnp.float32, -bound2, bound2)
    return w1, b1, w2, b2


if __name__ == "__main__":
    key = jax.random.PRNGKey(0)
    kx, kp = jax.random.split(key)
    B = 8
    x = jax.random.normal(kx, (B, 500), jnp.float32)
    w1, b1, w2, b2 = init_params(kp)

    params = prepare_params(w1, b1, w2, b2)   # one-time pad/cast, off the hot path
    out = lenet_server_side(x, params)
    out = jax.block_until_ready(out)
    assert out.shape == (B, 10)

    # Reference with matching bf16 input precision / f32 accumulation.
    xb, w1b, w2b = (x.astype(jnp.bfloat16), w1.astype(jnp.bfloat16),
                    w2.astype(jnp.bfloat16))
    h_ref = jnp.maximum(
        jnp.dot(xb, w1b, preferred_element_type=jnp.float32) + b1, 0.0)
    ref_bf16 = jnp.dot(h_ref.astype(jnp.bfloat16), w2b,
                       preferred_element_type=jnp.float32) + b2
    assert jnp.allclose(out, ref_bf16, atol=2e-3, rtol=2e-3)

    # Loose sanity check vs. the full-f32 reference (bf16 rounding slack).
    ref_f32 = jnp.maximum(x @ w1 + b1, 0.0) @ w2 + b2
    assert jnp.allclose(out, ref_f32, atol=3e-2, rtol=3e-2)

    print("KERNEL_OK")
</pallas_src>

<mosaic_0001>
module attributes {stable_mosaic.version = 11 : i64} {
  func.func @_lenet_server_kernel(%arg0: i32, %arg1: memref<8x500xf32, #tpu.memory_space<vmem>>, %arg2: memref<500x128xbf16, #tpu.memory_space<vmem>>, %arg3: memref<1x128xf32, #tpu.memory_space<vmem>>, %arg4: memref<128x10xbf16, #tpu.memory_space<vmem>>, %arg5: memref<1x10xf32, #tpu.memory_space<vmem>>, %arg6: memref<8x10xf32, #tpu.memory_space<vmem>>) attributes {dimension_semantics = [#tpu.dimension_semantics<parallel>], iteration_bounds = array<i64: 1>, scalar_prefetch = 0 : i64, scratch_operands = 0 : i64, tpu.core_type = #tpu.core_type<tc>, window_params = [{transform_indices = @transform_0, window_bounds = array<i64: 8, 500>}, {pipeline_mode = #tpu.pipeline_mode<synchronous>, transform_indices = @transform_1, window_bounds = array<i64: 500, 128>}, {pipeline_mode = #tpu.pipeline_mode<synchronous>, transform_indices = @transform_2, window_bounds = array<i64: 1, 128>}, {pipeline_mode = #tpu.pipeline_mode<synchronous>, transform_indices = @transform_3, window_bounds = array<i64: 128, 10>}, {pipeline_mode = #tpu.pipeline_mode<synchronous>, transform_indices = @transform_4, window_bounds = array<i64: 1, 10>}, {transform_indices = @transform_5, window_bounds = array<i64: 8, 10>}]} {
    %c0 = arith.constant 0 : index
    %c0_0 = arith.constant 0 : index
    %0 = vector.load %arg1[%c0, %c0_0] : memref<8x500xf32, #tpu.memory_space<vmem>>, vector<8x500xf32>
    %1 = arith.truncf %0 : vector<8x500xf32> to vector<8x500xbf16>
    %c0_1 = arith.constant 0 : index
    %c0_2 = arith.constant 0 : index
    %2 = vector.load %arg2[%c0_1, %c0_2] : memref<500x128xbf16, #tpu.memory_space<vmem>>, vector<500x128xbf16>
    %cst = arith.constant dense<0.000000e+00> : vector<8x128xf32>
    %3 = tpu.matmul %1, %2, %cst {dimension_numbers = #tpu.dot_dimension_numbers<[1], [0], [0], [1], [0, 0, 1, 1], [], []>} : vector<8x500xbf16>, vector<500x128xbf16>, vector<8x128xf32> -> vector<8x128xf32>
    %c0_3 = arith.constant 0 : index
    %c0_4 = arith.constant 0 : index
    %4 = vector.load %arg3[%c0_3, %c0_4] : memref<1x128xf32, #tpu.memory_space<vmem>>, vector<1x128xf32>
    %5 = vector.broadcast %4 : vector<1x128xf32> to vector<8x128xf32>
    %6 = arith.addf %3, %5 : vector<8x128xf32>
    %cst_5 = arith.constant 0.000000e+00 : f32
    %7 = vector.broadcast %cst_5 : f32 to vector<8x128xf32>
    %8 = arith.maximumf %6, %7 : vector<8x128xf32>
    %9 = arith.truncf %8 : vector<8x128xf32> to vector<8x128xbf16>
    %c0_6 = arith.constant 0 : index
    %c0_7 = arith.constant 0 : index
    %10 = vector.load %arg4[%c0_6, %c0_7] : memref<128x10xbf16, #tpu.memory_space<vmem>>, vector<128x10xbf16>
    %cst_8 = arith.constant dense<0.000000e+00> : vector<8x10xf32>
    %11 = tpu.matmul %9, %10, %cst_8 {dimension_numbers = #tpu.dot_dimension_numbers<[1], [0], [0], [1], [0, 0, 1, 1], [], []>} : vector<8x128xbf16>, vector<128x10xbf16>, vector<8x10xf32> -> vector<8x10xf32>
    %c0_9 = arith.constant 0 : index
    %c0_10 = arith.constant 0 : index
    %12 = vector.load %arg5[%c0_9, %c0_10] : memref<1x10xf32, #tpu.memory_space<vmem>>, vector<1x10xf32>
    %13 = vector.broadcast %12 : vector<1x10xf32> to vector<8x10xf32>
    %14 = arith.addf %11, %13 : vector<8x10xf32>
    %c0_11 = arith.constant 0 : index
    %c0_12 = arith.constant 0 : index
    %15 = vector.load %arg6[%c0_11, %c0_12] : memref<8x10xf32, #tpu.memory_space<vmem>>, vector<8x10xf32>
    tpu.vector_store %arg6[%c0_11, %c0_12], %14 {strides = array<i32>} : memref<8x10xf32, #tpu.memory_space<vmem>>, vector<8x10xf32>,
    return
  }
  func.func @transform_0(%arg0: i32) -> (i32, i32) {
    %c0_i32 = arith.constant 0 : i32
    %c0_i32_0 = arith.constant 0 : i32
    return %arg0, %c0_i32 : i32, i32
  }
  func.func @transform_1(%arg0: i32) -> (i32, i32) {
    %c0_i32 = arith.constant 0 : i32
    %c0_i32_0 = arith.constant 0 : i32
    %c0_i32_1 = arith.constant 0 : i32
    return %c0_i32, %c0_i32_0 : i32, i32
  }
  func.func @transform_2(%arg0: i32) -> (i32, i32) {
    %c0_i32 = arith.constant 0 : i32
    %c0_i32_0 = arith.constant 0 : i32
    %c0_i32_1 = arith.constant 0 : i32
    return %c0_i32, %c0_i32_0 : i32, i32
  }
  func.func @transform_3(%arg0: i32) -> (i32, i32) {
    %c0_i32 = arith.constant 0 : i32
    %c0_i32_0 = arith.constant 0 : i32
    %c0_i32_1 = arith.constant 0 : i32
    return %c0_i32, %c0_i32_0 : i32, i32
  }
  func.func @transform_4(%arg0: i32) -> (i32, i32) {
    %c0_i32 = arith.constant 0 : i32
    %c0_i32_0 = arith.constant 0 : i32
    %c0_i32_1 = arith.constant 0 : i32
    return %c0_i32, %c0_i32_0 : i32, i32
  }
  func.func @transform_5(%arg0: i32) -> (i32, i32) {
    %c0_i32 = arith.constant 0 : i32
    %c0_i32_0 = arith.constant 0 : i32
    return %arg0, %c0_i32 : i32, i32
  }
}

</mosaic_0001>

<llo_original>
// kernel: tpu_custom_call.1
$region0: #{tpu_custom_call.1}
  #allocation0 [shape = 'u32[]', space=smem, size = 0x4, offset = 0x4, fixed_abs, tag = 'smem constant byte address 0x4 - core index']
  #allocation1 [shape = 'u32[144,128]{1,0:T(1,128)}', space=vmem, size = 0x12000, scoped, tag = 'internal scratch']
  %s0 = inlined_call_operand.vmem [shape: f32[8,500], index: 0, kind: input, shape index: {}]
  %s1 = inlined_call_operand.hbm [shape: bf16[500,128], index: 1, kind: input, shape index: {}]
  %s2 = inlined_call_operand.vmem [shape: f32[1,128], index: 2, kind: input, shape index: {}]
  %s3 = inlined_call_operand.vmem [shape: bf16[128,10], index: 3, kind: input, shape index: {}]
  %s4 = inlined_call_operand.vmem [shape: f32[1,10], index: 4, kind: input, shape index: {}]
  %s5 = inlined_call_operand.hbm [shape: f32[8,10], index: 5, kind: output, shape index: {}]
  %s6 = sld [smem:[#allocation0]]
  $region34: #{tpu_custom_call.1} parent=0
    _
  %s8 = ssub.s32 1, %s6
  %s9 = scalar_select 0, %s8, %s6
  $region1: #{tpu_custom_call.1} parent=0
    #allocation2 [shape = 'u8[129024]{0}', space=vmem, size = 0x1f800, scoped, tag = 'input window, operand 1, single buffered']
    #allocation3 [shape = 's32[1]{0}', space=sflag, size = 0x4, scoped, tag = 'scoped memory for tpu_custom_call.1']
    #allocation4 [shape = 's32[1]{0}', space=sflag, size = 0x4, scoped, tag = 'scoped memory for tpu_custom_call.1']
    #allocation5 [shape = 'u8[4096]{0}', space=vmem, size = 0x1000, scoped, tag = 'output window, operand 0, single buffered']
    %10 = vsyncpa [#allocation3], 0
    %11 = vsyncpa [#allocation4], 0
    // Predicated region
    $region2: #{tpu_custom_call.1} parent=1 // pred_check
      _
    $region3: #{tpu_custom_call.1} parent=1 // pred_check_branch
      %13 = sbr.rel (0) target = $region5
    $region4: #{tpu_custom_call.1} parent=1 // pred_region
      _
    $region5: #{tpu_custom_call.1} parent=1 // pred_fallthru
      _
    // Predicated region
    $region6: #{tpu_custom_call.1} parent=1 // pred_check
      _
    $region7: #{tpu_custom_call.1} parent=1 // pred_check_branch
      %15 = sbr.rel (0) target = $region9
    $region8: #{tpu_custom_call.1} parent=1 // pred_region
      %s17 = ssub.s32 4032, 4032
      %18 = vsyncadd [#allocation3], %s17
      %s19 = sshll.u32 [#allocation2], 4
      %s20 = int_to_ptr.vmem [resolvable:$true] %s19
      %25 = dma.hbm_to_vmem [thread:$0]  %s1, 4032, %s20, [#allocation3], 64, 64, 4
    $region9: #{tpu_custom_call.1} parent=1 // pred_fallthru
      _
    // Predicated region
    $region10: #{tpu_custom_call.1} parent=1 // pred_check
      _
    $region11: #{tpu_custom_call.1} parent=1 // pred_check_branch
      %27 = sbr.rel (0) target = $region13
    $region12: #{tpu_custom_call.1} parent=1 // pred_region
      _
    $region13: #{tpu_custom_call.1} parent=1 // pred_fallthru
      _
    // Predicated region
    $region14: #{tpu_custom_call.1} parent=1 // pred_check
      _
    $region15: #{tpu_custom_call.1} parent=1 // pred_check_branch
      %29 = sbr.rel (0) target = $region17
    $region16: #{tpu_custom_call.1} parent=1 // pred_region
      _
    $region17: #{tpu_custom_call.1} parent=1 // pred_fallthru
      _
    // Predicated region
    $region18: #{tpu_custom_call.1} parent=1 // pred_check
      _
    $region19: #{tpu_custom_call.1} parent=1 // pred_check_branch
      %31 = sbr.rel (0) target = $region21
    $region20: #{tpu_custom_call.1} parent=1 // pred_region
      _
    $region21: #{tpu_custom_call.1} parent=1 // pred_fallthru
      _
    // Predicated region
    $region22: #{tpu_custom_call.1} parent=1 // pred_check
      _
    $region23: #{tpu_custom_call.1} parent=1 // pred_check_branch
      %33 = sbr.rel (0) target = $region25
    $region24: #{tpu_custom_call.1} parent=1 // pred_region
      %34 = dma.done [#allocation3], 4032
    $region25: #{tpu_custom_call.1} parent=1 // pred_fallthru
      _
    %v36 = vld [vmem:[%s0] sm:$0xff]
    %v37 = vld [vmem:[%s0 + $0x8] sm:$0xff]
    %v38 = vld [vmem:[%s0 + $0x10] sm:$0xff]
    %v39 = vld [vmem:[%s0 + $0x18] sm:$0xff]
    %v40 = vpack.c.bf16 %v36, %v36
    %v41 = vpack.c.bf16 %v37, %v37
    %v42 = vpack.c.bf16 %v38, %v38
    %v43 = vpack.c.bf16 %v39, %v39
    %v44 = vld [vmem:[#allocation2] sm:$0xf]
    %v45 = vld [vmem:[#allocation2 + $0x4] sm:$0xf]
    %v46 = vld [vmem:[#allocation2 + $0x8] sm:$0xf]
    %v47 = vld [vmem:[#allocation2 + $0xc] sm:$0xf]
    %v48 = vld [vmem:[#allocation2 + $0x10] sm:$0xf]
    %v49 = vld [vmem:[#allocation2 + $0x14] sm:$0xf]
    %v50 = vld [vmem:[#allocation2 + $0x18] sm:$0xf]
    %v51 = vld [vmem:[#allocation2 + $0x1c] sm:$0xf]
    %v52 = vld [vmem:[#allocation2 + $0x20] sm:$0xf]
    %v53 = vld [vmem:[#allocation2 + $0x24] sm:$0xf]
    %v54 = vld [vmem:[#allocation2 + $0x28] sm:$0xf]
    %v55 = vld [vmem:[#allocation2 + $0x2c] sm:$0xf]
    %v56 = vld [vmem:[#allocation2 + $0x30] sm:$0xf]
    %v57 = vld [vmem:[#allocation2 + $0x34] sm:$0xf]
    %v58 = vld [vmem:[#allocation2 + $0x38] sm:$0xf]
    %v59 = vld [vmem:[#allocation2 + $0x3c] sm:$0xf]
    %v60 = vld [vmem:[#allocation2 + $0x40] sm:$0xf]
    %v61 = vld [vmem:[#allocation2 + $0x44] sm:$0xf]
    %v62 = vld [vmem:[#allocation2 + $0x48] sm:$0xf]
    %v63 = vld [vmem:[#allocation2 + $0x4c] sm:$0xf]
    %v64 = vld [vmem:[#allocation2 + $0x50] sm:$0xf]
    %v65 = vld [vmem:[#allocation2 + $0x54] sm:$0xf]
    %v66 = vld [vmem:[#allocation2 + $0x58] sm:$0xf]
    %v67 = vld [vmem:[#allocation2 + $0x5c] sm:$0xf]
    %v68 = vld [vmem:[#allocation2 + $0x60] sm:$0xf]
    %v69 = vld [vmem:[#allocation2 + $0x64] sm:$0xf]
    %v70 = vld [vmem:[#allocation2 + $0x68] sm:$0xf]
    %v71 = vld [vmem:[#allocation2 + $0x6c] sm:$0xf]
    %v72 = vld [vmem:[#allocation2 + $0x70] sm:$0xf]
    %v73 = vld [vmem:[#allocation2 + $0x74] sm:$0xf]
    %v74 = vld [vmem:[#allocation2 + $0x78] sm:$0xf]
    %v75 = vld [vmem:[#allocation2 + $0x7c] sm:$0xf]
    %v76 = vld [vmem:[#allocation2 + $0x80] sm:$0xf]
    %v77 = vld [vmem:[#allocation2 + $0x84] sm:$0xf]
    %v78 = vld [vmem:[#allocation2 + $0x88] sm:$0xf]
    %v79 = vld [vmem:[#allocation2 + $0x8c] sm:$0xf]
    %v80 = vld [vmem:[#allocation2 + $0x90] sm:$0xf]
    %v81 = vld [vmem:[#allocation2 + $0x94] sm:$0xf]
    %v82 = vld [vmem:[#allocation2 + $0x98] sm:$0xf]
    %v83 = vld [vmem:[#allocation2 + $0x9c] sm:$0xf]
    %v84 = vld [vmem:[#allocation2 + $0xa0] sm:$0xf]
    %v85 = vld [vmem:[#allocation2 + $0xa4] sm:$0xf]
    %v86 = vld [vmem:[#allocation2 + $0xa8] sm:$0xf]
    %v87 = vld [vmem:[#allocation2 + $0xac] sm:$0xf]
    %v88 = vld [vmem:[#allocation2 + $0xb0] sm:$0xf]
    %v89 = vld [vmem:[#allocation2 + $0xb4] sm:$0xf]
    %v90 = vld [vmem:[#allocation2 + $0xb8] sm:$0xf]
    %v91 = vld [vmem:[#allocation2 + $0xbc] sm:$0xf]
    %v92 = vld [vmem:[#allocation2 + $0xc0] sm:$0xf]
    %v93 = vld [vmem:[#allocation2 + $0xc4] sm:$0xf]
    %v94 = vld [vmem:[#allocation2 + $0xc8] sm:$0xf]
    %v95 = vld [vmem:[#allocation2 + $0xcc] sm:$0xf]
    %v96 = vld [vmem:[#allocation2 + $0xd0] sm:$0xf]
    %v97 = vld [vmem:[#allocation2 + $0xd4] sm:$0xf]
    %v98 = vld [vmem:[#allocation2 + $0xd8] sm:$0xf]
    %v99 = vld [vmem:[#allocation2 + $0xdc] sm:$0xf]
    %v100 = vld [vmem:[#allocation2 + $0xe0] sm:$0xf]
    %v101 = vld [vmem:[#allocation2 + $0xe4] sm:$0xf]
    %v102 = vld [vmem:[#allocation2 + $0xe8] sm:$0xf]
    %v103 = vld [vmem:[#allocation2 + $0xec] sm:$0xf]
    %v104 = vld [vmem:[#allocation2 + $0xf0] sm:$0xf]
    %v105 = vld [vmem:[#allocation2 + $0xf4] sm:$0xf]
    %v106 = vld [vmem:[#allocation2 + $0xf8] sm:$0x3]
    %v107 = vld [vmem:[%s2] sm:$0x1]
    %v109 = vlaneseq
    %v110 = vshrl.u32 %v109, 7
    %v111 = vsub.s32 0, %v110
    %v112 = vrot.slane %v107, %v111
    %v177 = vunpack.c.l.b16 %v44
    %v178 = vunpack.c.l.b16 %v45
    %v179 = vunpack.c.l.b16 %v46
    %v180 = vunpack.c.l.b16 %v47
    %v181 = vunpack.c.l.b16 %v48
    %v182 = vunpack.c.l.b16 %v49
    %v183 = vunpack.c.l.b16 %v50
    %v184 = vunpack.c.l.b16 %v51
    %v185 = vunpack.c.l.b16 %v52
    %v186 = vunpack.c.l.b16 %v53
    %v187 = vunpack.c.l.b16 %v54
    %v188 = vunpack.c.l.b16 %v55
    %v189 = vunpack.c.l.b16 %v56
    %v190 = vunpack.c.l.b16 %v57
    %v191 = vunpack.c.l.b16 %v58
    %v192 = vunpack.c.l.b16 %v59
    %v193 = vunpack.c.l.b16 %v60
    %v194 = vunpack.c.l.b16 %v61
    %v195 = vunpack.c.l.b16 %v62
    %v196 = vunpack.c.l.b16 %v63
    %v197 = vunpack.c.l.b16 %v64
    %v198 = vunpack.c.l.b16 %v65
    %v199 = vunpack.c.l.b16 %v66
    %v200 = vunpack.c.l.b16 %v67
    %v201 = vunpack.c.l.b16 %v68
    %v202 = vunpack.c.l.b16 %v69
    %v203 = vunpack.c.l.b16 %v70
    %v204 = vunpack.c.l.b16 %v71
    %v205 = vunpack.c.l.b16 %v72
    %v206 = vunpack.c.l.b16 %v73
    %v207 = vunpack.c.l.b16 %v74
    %v208 = vunpack.c.l.b16 %v75
    %v209 = vunpack.c.l.b16 %v76
    %v210 = vunpack.c.l.b16 %v77
    %v211 = vunpack.c.l.b16 %v78
    %v212 = vunpack.c.l.b16 %v79
    %v213 = vunpack.c.l.b16 %v80
    %v214 = vunpack.c.l.b16 %v81
    %v215 = vunpack.c.l.b16 %v82
    %v216 = vunpack.c.l.b16 %v83
    %v217 = vunpack.c.l.b16 %v84
    %v218 = vunpack.c.l.b16 %v85
    %v219 = vunpack.c.l.b16 %v86
    %v220 = vunpack.c.l.b16 %v87
    %v221 = vunpack.c.l.b16 %v88
    %v222 = vunpack.c.l.b16 %v89
    %v223 = vunpack.c.l.b16 %v90
    %v224 = vunpack.c.l.b16 %v91
    %v225 = vunpack.c.l.b16 %v92
    %v226 = vunpack.c.l.b16 %v93
    %v227 = vunpack.c.l.b16 %v94
    %v228 = vunpack.c.l.b16 %v95
    %v229 = vunpack.c.l.b16 %v96
    %v230 = vunpack.c.l.b16 %v97
    %v231 = vunpack.c.l.b16 %v98
    %v232 = vunpack.c.l.b16 %v99
    %v233 = vunpack.c.l.b16 %v100
    %v234 = vunpack.c.l.b16 %v101
    %v235 = vunpack.c.l.b16 %v102
    %v236 = vunpack.c.l.b16 %v103
    %v237 = vunpack.c.l.b16 %v104
    %v238 = vunpack.c.l.b16 %v105
    %v239 = vunpack.c.l.b16 %v106
    %v240 = vpack.c.b16 %v178, %v177
    %v241 = vpack.c.b16 %v180, %v179
    %v242 = vpack.c.b16 %v182, %v181
    %v243 = vpack.c.b16 %v184, %v183
    %v244 = vpack.c.b16 %v186, %v185
    %v245 = vpack.c.b16 %v188, %v187
    %v246 = vpack.c.b16 %v190, %v189
    %v247 = vpack.c.b16 %v192, %v191
    %v248 = vpack.c.b16 %v194, %v193
    %v249 = vpack.c.b16 %v196, %v195
    %v250 = vpack.c.b16 %v198, %v197
    %v251 = vpack.c.b16 %v200, %v199
    %v252 = vpack.c.b16 %v202, %v201
    %v253 = vpack.c.b16 %v204, %v203
    %v254 = vpack.c.b16 %v206, %v205
    %v255 = vpack.c.b16 %v208, %v207
    %v256 = vpack.c.b16 %v210, %v209
    %v257 = vpack.c.b16 %v212, %v211
    %v258 = vpack.c.b16 %v214, %v213
    %v259 = vpack.c.b16 %v216, %v215
    %v260 = vpack.c.b16 %v218, %v217
    %v261 = vpack.c.b16 %v220, %v219
    %v262 = vpack.c.b16 %v222, %v221
    %v263 = vpack.c.b16 %v224, %v223
    %v264 = vpack.c.b16 %v226, %v225
    %v265 = vpack.c.b16 %v228, %v227
    %v266 = vpack.c.b16 %v230, %v229
    %v267 = vpack.c.b16 %v232, %v231
    %v268 = vpack.c.b16 %v234, %v233
    %v269 = vpack.c.b16 %v236, %v235
    %v270 = vpack.c.b16 %v238, %v237
    %v271 = vpack.c.b16 %v239, %v239
    %vm303 = vcmask 949248
    %v305 = vsel %vm303, %v43, 0
    %vm307 = vcmask 1041408
    %v309 = vsel %vm307, %v271, 0
    %311 = vmatprep.subr.bf16.mxu0 0
    %312 = vmatpush1.bf16.msra.mxu0 %v240
    %313 = vmatprep.subr.bf16.mxu0 0
    %314 = vmatpush1.bf16.msra.mxu0 %v241
    %315 = vmatprep.subr.bf16.mxu0 0
    %316 = vmatpush1.bf16.msra.mxu0 %v242
    %317 = vmatprep.subr.bf16.mxu0 0
    %318 = vmatpush1.bf16.msra.mxu0 %v243
    %319 = vmatprep.subr.bf16.mxu0 0
    %320 = vmatpush1.bf16.msra.mxu0 %v244
    %321 = vmatprep.subr.bf16.mxu0 0
    %322 = vmatpush1.bf16.msra.mxu0 %v245
    %323 = vmatprep.subr.bf16.mxu0 0
    %324 = vmatpush1.bf16.msra.mxu0 %v246
    %325 = vmatprep.subr.bf16.mxu0 0
    %326 = vmatpush1.bf16.msra.mxu0 %v247
    %327 = vmatprep.subr.bf16.mxu0 0
    %328 = vmatpush1.bf16.msra.mxu0 %v248
    %329 = vmatprep.subr.bf16.mxu0 0
    %330 = vmatpush1.bf16.msra.mxu0 %v249
    %331 = vmatprep.subr.bf16.mxu0 0
    %332 = vmatpush1.bf16.msra.mxu0 %v250
    %333 = vmatprep.subr.bf16.mxu0 0
    %334 = vmatpush1.bf16.msra.mxu0 %v251
    %335 = vmatprep.subr.bf16.mxu0 0
    %336 = vmatpush1.bf16.msra.mxu0 %v252
    %337 = vmatprep.subr.bf16.mxu0 0
    %338 = vmatpush1.bf16.msra.mxu0 %v253
    %339 = vmatprep.subr.bf16.mxu0 0
    %340 = vmatpush1.bf16.msra.mxu0 %v254
    %341 = vmatprep.subr.bf16.mxu0 0
    %342 = vmatpush1.bf16.msra.mxu0 %v255
    %343 = vmatprep.mubr.bf16.mxu0 %v41
    %344 = vmatmul.mubr.bf16.gmra.mrb[0].mxu0 %v40
    %v345 = vpop.f32.mrb[0].mxu0
    %v346 = vadd.f32 %v112, %v345
    %v347 = vpop.f32.mrb[0].mxu0
    %v348 = vpop.f32.mrb[0].mxu0
    %v349 = vpop.f32.mrb[0].mxu0
    %350 = vdwg.mxu0
    %351 = vmatprep.subr.bf16.mxu0 0
    %352 = vmatpush1.bf16.msra.mxu0 %v256
    %353 = vmatprep.subr.bf16.mxu0 0
    %354 = vmatpush1.bf16.msra.mxu0 %v257
    %355 = vmatprep.subr.bf16.mxu0 0
    %356 = vmatpush1.bf16.msra.mxu0 %v258
    %357 = vmatprep.subr.bf16.mxu0 0
    %358 = vmatpush1.bf16.msra.mxu0 %v259
    %359 = vmatprep.subr.bf16.mxu0 0
    %360 = vmatpush1.bf16.msra.mxu0 %v260
    %361 = vmatprep.subr.bf16.mxu0 0
    %362 = vmatpush1.bf16.msra.mxu0 %v261
    %363 = vmatprep.subr.bf16.mxu0 0
    %364 = vmatpush1.bf16.msra.mxu0 %v262
    %365 = vmatprep.subr.bf16.mxu0 0
    %366 = vmatpush1.bf16.msra.mxu0 %v263
    %367 = vmatprep.subr.bf16.mxu0 0
    %368 = vmatpush1.bf16.msra.mxu0 %v264
    %369 = vmatprep.subr.bf16.mxu0 0
    %370 = vmatpush1.bf16.msra.mxu0 %v265
    %371 = vmatprep.subr.bf16.mxu0 0
    %372 = vmatpush1.bf16.msra.mxu0 %v266
    %373 = vmatprep.subr.bf16.mxu0 0
    %374 = vmatpush1.bf16.msra.mxu0 %v267
    %375 = vmatprep.subr.bf16.mxu0 0
    %376 = vmatpush1.bf16.msra.mxu0 %v268
    %377 = vmatprep.subr.bf16.mxu0 0
    %378 = vmatpush1.bf16.msra.mxu0 %v269
    %379 = vmatprep.subr.bf16.mxu0 0
    %380 = vmatpush1.bf16.msra.mxu0 %v270
    %381 = vmatprep.subr.bf16.mxu0 0
    %382 = vmatpush1.bf16.msra.mxu0 %v309
    %383 = vmatprep.mubr.bf16.mxu0 %v305
    %384 = vmatmul.mubr.bf16.gmra.mrb[0].mxu0 %v42
    %v385 = vpop.f32.mrb[0].mxu0
    %v386 = vadd.f32 %v346, %v385
    %v387 = vpop.f32.mrb[0].mxu0
    %v388 = vpop.f32.mrb[0].mxu0
    %v389 = vpop.f32.mrb[0].mxu0
    %390 = vdwg.mxu0
    %v391 = vmax.f32 %v386, 0.0
    %v392 = vpack.c.bf16 %v391, %v391
    %v393 = vld [vmem:[%s3] sm:$0xf]
    %v394 = vld [vmem:[%s3 + $0x4] sm:$0xf]
    %v395 = vld [vmem:[%s3 + $0x8] sm:$0xf]
    %v396 = vld [vmem:[%s3 + $0xc] sm:$0xf]
    %v397 = vld [vmem:[%s3 + $0x10] sm:$0xf]
    %v398 = vld [vmem:[%s3 + $0x14] sm:$0xf]
    %v399 = vld [vmem:[%s3 + $0x18] sm:$0xf]
    %v400 = vld [vmem:[%s3 + $0x1c] sm:$0xf]
    %v401 = vld [vmem:[%s3 + $0x20] sm:$0xf]
    %v402 = vld [vmem:[%s3 + $0x24] sm:$0xf]
    %v403 = vld [vmem:[%s3 + $0x28] sm:$0xf]
    %v404 = vld [vmem:[%s3 + $0x2c] sm:$0xf]
    %v405 = vld [vmem:[%s3 + $0x30] sm:$0xf]
    %v406 = vld [vmem:[%s3 + $0x34] sm:$0xf]
    %v407 = vld [vmem:[%s3 + $0x38] sm:$0xf]
    %v408 = vld [vmem:[%s3 + $0x3c] sm:$0xf]
    %v409 = vld [vmem:[%s4] sm:$0x1]
    %v411 = vlaneseq
    %v412 = vshrl.u32 %v411, 7
    %v413 = vsub.s32 0, %v412
    %v414 = vrot.slane %v409, %v413
    %v432 = vunpack.c.l.b16 %v393
    %v433 = vunpack.c.l.b16 %v394
    %v434 = vunpack.c.l.b16 %v395
    %v435 = vunpack.c.l.b16 %v396
    %v436 = vunpack.c.l.b16 %v397
    %v437 = vunpack.c.l.b16 %v398
    %v438 = vunpack.c.l.b16 %v399
    %v439 = vunpack.c.l.b16 %v400
    %v440 = vunpack.c.l.b16 %v401
    %v441 = vunpack.c.l.b16 %v402
    %v442 = vunpack.c.l.b16 %v403
    %v443 = vunpack.c.l.b16 %v404
    %v444 = vunpack.c.l.b16 %v405
    %v445 = vunpack.c.l.b16 %v406
    %v446 = vunpack.c.l.b16 %v407
    %v447 = vunpack.c.l.b16 %v408
    %v448 = vpack.c.b16 %v433, %v432
    %v449 = vpack.c.b16 %v435, %v434
    %v450 = vpack.c.b16 %v437, %v436
    %v451 = vpack.c.b16 %v439, %v438
    %v452 = vpack.c.b16 %v441, %v440
    %v453 = vpack.c.b16 %v443, %v442
    %v454 = vpack.c.b16 %v445, %v444
    %v455 = vpack.c.b16 %v447, %v446
    %464 = vmatprep.subr.bf16.mxu0 0
    %465 = vmatpush1.bf16.msra.mxu0 %v448
    %466 = vmatprep.subr.bf16.mxu0 0
    %467 = vmatpush1.bf16.msra.mxu0 %v449
    %468 = vmatprep.subr.bf16.mxu0 0
    %469 = vmatpush1.bf16.msra.mxu0 %v450
    %470 = vmatprep.subr.bf16.mxu0 0
    %471 = vmatpush1.bf16.msra.mxu0 %v451
    %472 = vmatprep.subr.bf16.mxu0 0
    %473 = vmatpush1.bf16.msra.mxu0 %v452
    %474 = vmatprep.subr.bf16.mxu0 0
    %475 = vmatpush1.bf16.msra.mxu0 %v453
    %476 = vmatprep.subr.bf16.mxu0 0
    %477 = vmatpush1.bf16.msra.mxu0 %v454
    %478 = vmatprep.subr.bf16.mxu0 0
    %479 = vmatpush1.bf16.msra.mxu0 %v455
    %480 = vmatprep.subr.bf16.mxu0 0
    %481 = vmatpush1.bf16.msra.mxu0 0
    %482 = vmatprep.subr.bf16.mxu0 0
    %483 = vmatpush1.bf16.msra.mxu0 0
    %484 = vmatprep.subr.bf16.mxu0 0
    %485 = vmatpush1.bf16.msra.mxu0 0
    %486 = vmatprep.subr.bf16.mxu0 0
    %487 = vmatpush1.bf16.msra.mxu0 0
    %488 = vmatprep.subr.bf16.mxu0 0
    %489 = vmatpush1.bf16.msra.mxu0 0
    %490 = vmatprep.subr.bf16.mxu0 0
    %491 = vmatpush1.bf16.msra.mxu0 0
    %492 = vmatprep.subr.bf16.mxu0 0
    %493 = vmatpush1.bf16.msra.mxu0 0
    %494 = vmatprep.subr.bf16.mxu0 0
    %495 = vmatpush1.bf16.msra.mxu0 0
    %496 = vmatprep.mubr.bf16.mxu0 0
    %497 = vmatmul.mubr.bf16.gmra.mrb[0].mxu0 %v392
    %v498 = vpop.f32.mrb[0].mxu0
    %v499 = vadd.f32 %v414, %v498
    %v500 = vpop.f32.mrb[0].mxu0
    %v501 = vpop.f32.mrb[0].mxu0
    %v502 = vpop.f32.mrb[0].mxu0
    %503 = vdwg.mxu0
    %vm504 = vcmask 80896
    %505 = vst.msk [vmem:[#allocation5] sm:$0xff] %vm504, %v499
    // Predicated region
    $region26: #{tpu_custom_call.1} parent=1 // pred_check
      _
    $region27: #{tpu_custom_call.1} parent=1 // pred_check_branch
      %507 = sbr.rel (0) target = $region29
    $region28: #{tpu_custom_call.1} parent=1 // pred_region
      %s509 = ssub.s32 128, 128
      %510 = vsyncadd [#allocation4], %s509
      %s512 = sshll.u32 [#allocation5], 4
      %s513 = int_to_ptr.vmem [resolvable:$true] %s512
      %515 = dma.vmem_to_hbm [thread:$0]  %s513, 128, %s5, [#allocation4]
    $region29: #{tpu_custom_call.1} parent=1 // pred_fallthru
      _
    // Predicated region
    $region30: #{tpu_custom_call.1} parent=1 // pred_check
      _
    $region31: #{tpu_custom_call.1} parent=1 // pred_check_branch
      %517 = sbr.rel (0) target = $region33
    $region32: #{tpu_custom_call.1} parent=1 // pred_region
      %518 = dma.done [#allocation4], 128
    $region33: #{tpu_custom_call.1} parent=1 // pred_fallthru
      _
    %519 = vsyncpa [#allocation3], 1
    %520 = vsyncpa [#allocation4], 1

</llo_original>
